<compile_context>
chip_gen: v6e
topology: v6e:2x2x1
jax: 0.10.0
libtpu: 0.0.40
codegen_flags: <defaults>
</compile_context>

<pallas_src>
import functools

import jax
import jax.numpy as jnp
from jax.experimental import pallas as pl
from jax.experimental.pallas import tpu as pltpu

_LANES = 512          # lane-dense last dim (multiple of 128)
_MAX_TILE_ROWS = 1024  # cap tile at 1024 x 512 f32 = 2 MiB


def _mul_const_kernel(x_ref, o_ref, *, scale):
    # Non-learnable path: scale is a compile-time Python constant.
    o_ref[...] = x_ref[...] * jnp.asarray(scale, dtype=x_ref.dtype)


def _mul_smem_kernel(scale_ref, x_ref, o_ref):
    # Learnable path: scale is a traced float32 scalar living in SMEM.
    s = scale_ref[0]
    o_ref[...] = (x_ref[...].astype(jnp.float32) * s).astype(o_ref.dtype)


def _padded_2d(x):
    """Flatten x to a lane-dense, tile-aligned (rows, _LANES) slab."""
    n = x.size
    dt = x.dtype
    lanes = _LANES

    # Sublane alignment for the dtype: 8 (4B), 16 (2B), 32 (1B).
    itemsize = jnp.dtype(dt).itemsize
    sub = max(8, 32 // max(itemsize, 1))

    rows = pl.cdiv(n, lanes)
    tile_rows = min(_MAX_TILE_ROWS, pl.cdiv(rows, sub) * sub)
    padded_rows = pl.cdiv(rows, tile_rows) * tile_rows
    n_pad = padded_rows * lanes

    x_flat = x.reshape(-1)
    if n_pad > n:
        x_flat = jnp.pad(x_flat, (0, n_pad - n))
    return x_flat.reshape(padded_rows, lanes), tile_rows, padded_rows // tile_rows


def multiply_by(x: jax.Array, scale_value=5.0) -> jax.Array:
    """Pallas equivalent of MultiplyBy.forward.

    scale_value may be a Python float (learnable=False) or a traced JAX scalar
    (learnable=True parameter); both compute y = x * scale_value.
    """
    orig_shape = x.shape
    orig_dtype = x.dtype
    n = x.size

    x2d, tile_rows, num_tiles = _padded_2d(x)

    block = pl.BlockSpec((tile_rows, _LANES), lambda i: (i, 0))
    compiler_params = pltpu.CompilerParams(
        dimension_semantics=("parallel",),       # shard grid across TCs (v7x)
        vmem_limit_bytes=32 << 20,               # safe on all generations;
        # double-buffered in+out at <=2 MiB/tile stays well under this.
    )

    static_scale = isinstance(scale_value, (int, float))

    if static_scale:
        kernel = functools.partial(_mul_const_kernel, scale=float(scale_value))
        out2d = pl.pallas_call(
            kernel,
            out_shape=jax.ShapeDtypeStruct(x2d.shape, orig_dtype),
            grid=(num_tiles,),
            in_specs=[block],
            out_specs=block,
            compiler_params=compiler_params,
        )(x2d)
    else:
        scale = jnp.asarray(scale_value, dtype=jnp.float32).reshape(1)
        out2d = pl.pallas_call(
            _mul_smem_kernel,
            out_shape=jax.ShapeDtypeStruct(x2d.shape, orig_dtype),
            grid=(num_tiles,),
            in_specs=[
                pl.BlockSpec(memory_space=pltpu.SMEM),  # f32 scalar, untiled
                block,
            ],
            out_specs=block,
            compiler_params=compiler_params,
        )(scale, x2d)

    return out2d.reshape(-1)[:n].reshape(orig_shape)


if __name__ == "__main__":
    key = jax.random.PRNGKey(0)
    # Small NCHW input consistent with a conv-feature-map use case.
    x = jax.random.normal(key, (2, 4, 16, 16), dtype=jnp.float32)

    scale_value = 5.0  # MultiplyBy default (learnable=False)

    # Non-learnable (constant-scale) path.
    y = multiply_by(x, scale_value)
    y = jax.block_until_ready(y)
    ref = x * scale_value
    assert y.shape == x.shape and y.dtype == x.dtype
    assert jnp.allclose(y, ref, rtol=1e-6, atol=1e-6)

    # Learnable (traced-scale) path, as a scalar parameter.
    scale_param = jnp.asarray(scale_value, dtype=jnp.float32)
    y2 = multiply_by(x, scale_param)
    y2 = jax.block_until_ready(y2)
    assert jnp.allclose(y2, ref, rtol=1e-6, atol=1e-6)

    print("KERNEL_OK")
</pallas_src>

<mosaic_0001>
module attributes {stable_mosaic.version = 11 : i64} {
  func.func @_mul_const_kernel(%arg0: i32, %arg1: memref<8x512xf32, #tpu.memory_space<vmem>>, %arg2: memref<8x512xf32, #tpu.memory_space<vmem>>) attributes {dimension_semantics = [#tpu.dimension_semantics<parallel>], iteration_bounds = array<i64: 1>, scalar_prefetch = 0 : i64, scratch_operands = 0 : i64, tpu.core_type = #tpu.core_type<tc>, window_params = [{transform_indices = @transform_0, window_bounds = array<i64: 8, 512>}, {transform_indices = @transform_1, window_bounds = array<i64: 8, 512>}]} {
    %c0 = arith.constant 0 : index
    %c0_0 = arith.constant 0 : index
    %0 = vector.load %arg1[%c0, %c0_0] : memref<8x512xf32, #tpu.memory_space<vmem>>, vector<8x512xf32>
    %cst = arith.constant 5.000000e+00 : f32
    %1 = vector.broadcast %cst : f32 to vector<8x512xf32>
    %2 = arith.mulf %0, %1 : vector<8x512xf32>
    %c0_1 = arith.constant 0 : index
    %c0_2 = arith.constant 0 : index
    %3 = vector.load %arg2[%c0_1, %c0_2] : memref<8x512xf32, #tpu.memory_space<vmem>>, vector<8x512xf32>
    tpu.vector_store %arg2[%c0_1, %c0_2], %2 {strides = array<i32>} : memref<8x512xf32, #tpu.memory_space<vmem>>, vector<8x512xf32>,
    return
  }
  func.func @transform_0(%arg0: i32) -> (i32, i32) {
    %c0_i32 = arith.constant 0 : i32
    %c0_i32_0 = arith.constant 0 : i32
    return %arg0, %c0_i32 : i32, i32
  }
  func.func @transform_1(%arg0: i32) -> (i32, i32) {
    %c0_i32 = arith.constant 0 : i32
    %c0_i32_0 = arith.constant 0 : i32
    return %arg0, %c0_i32 : i32, i32
  }
}

</mosaic_0001>

<llo_original>
// kernel: tpu_custom_call.1
$region0: #{tpu_custom_call.1}
  #allocation0 [shape = 'u32[]', space=smem, size = 0x4, offset = 0x4, fixed_abs, tag = 'smem constant byte address 0x4 - core index']
  #allocation1 [shape = 'u32[144,128]{1,0:T(1,128)}', space=vmem, size = 0x12000, scoped, tag = 'internal scratch']
  %s0 = inlined_call_operand.hbm [shape: f32[8,512], index: 0, kind: input, shape index: {}]
  %s1 = inlined_call_operand.hbm [shape: f32[8,512], index: 1, kind: output, shape index: {}]
  %s2 = sld [smem:[#allocation0]]
  $region18: #{tpu_custom_call.1} parent=0
    _
  %s4 = ssub.s32 1, %s2
  %s5 = scalar_select 0, %s4, %s2
  $region1: #{tpu_custom_call.1} parent=0
    #allocation2 [shape = 'u8[16384]{0}', space=vmem, size = 0x4000, scoped, tag = 'input window, operand 0, single buffered']
    #allocation3 [shape = 's32[1]{0}', space=sflag, size = 0x4, scoped, tag = 'scoped memory for tpu_custom_call.1']
    #allocation4 [shape = 's32[1]{0}', space=sflag, size = 0x4, scoped, tag = 'scoped memory for tpu_custom_call.1']
    #allocation5 [shape = 'u8[16384]{0}', space=vmem, size = 0x4000, scoped, tag = 'output window, operand 0, single buffered']
    %6 = vsyncpa [#allocation3], 0
    %7 = vsyncpa [#allocation4], 0
    // Predicated region
    $region2: #{tpu_custom_call.1} parent=1 // pred_check
      _
    $region3: #{tpu_custom_call.1} parent=1 // pred_check_branch
      %9 = sbr.rel (0) target = $region5
    $region4: #{tpu_custom_call.1} parent=1 // pred_region
      %s11 = ssub.s32 512, 512
      %12 = vsyncadd [#allocation3], %s11
      %s14 = sshll.u32 [#allocation2], 4
      %s15 = int_to_ptr.vmem [resolvable:$true] %s14
      %17 = dma.hbm_to_vmem [thread:$0]  %s0, 512, %s15, [#allocation3]
    $region5: #{tpu_custom_call.1} parent=1 // pred_fallthru
      _
    // Predicated region
    $region6: #{tpu_custom_call.1} parent=1 // pred_check
      _
    $region7: #{tpu_custom_call.1} parent=1 // pred_check_branch
      %19 = sbr.rel (0) target = $region9
    $region8: #{tpu_custom_call.1} parent=1 // pred_region
      %20 = dma.done [#allocation3], 512
    $region9: #{tpu_custom_call.1} parent=1 // pred_fallthru
      _
    %v21 = vld [vmem:[#allocation2] sm:$0xff]
    %v22 = vld [vmem:[#allocation2 + $0x8] sm:$0xff]
    %v23 = vld [vmem:[#allocation2 + $0x10] sm:$0xff]
    %v24 = vld [vmem:[#allocation2 + $0x18] sm:$0xff]
    %v25 = vmul.f32 %v21, 5.0
    %v26 = vmul.f32 %v22, 5.0
    %v27 = vmul.f32 %v23, 5.0
    %v28 = vmul.f32 %v24, 5.0
    %29 = vst [vmem:[#allocation5] sm:$0xff] %v25
    %30 = vst [vmem:[#allocation5 + $0x8] sm:$0xff] %v26
    %31 = vst [vmem:[#allocation5 + $0x10] sm:$0xff] %v27
    %32 = vst [vmem:[#allocation5 + $0x18] sm:$0xff] %v28
    // Predicated region
    $region10: #{tpu_custom_call.1} parent=1 // pred_check
      _
    $region11: #{tpu_custom_call.1} parent=1 // pred_check_branch
      %34 = sbr.rel (0) target = $region13
    $region12: #{tpu_custom_call.1} parent=1 // pred_region
      %s36 = ssub.s32 512, 512
      %37 = vsyncadd [#allocation4], %s36
      %s39 = sshll.u32 [#allocation5], 4
      %s40 = int_to_ptr.vmem [resolvable:$true] %s39
      %42 = dma.vmem_to_hbm [thread:$0]  %s40, 512, %s1, [#allocation4]
    $region13: #{tpu_custom_call.1} parent=1 // pred_fallthru
      _
    // Predicated region
    $region14: #{tpu_custom_call.1} parent=1 // pred_check
      _
    $region15: #{tpu_custom_call.1} parent=1 // pred_check_branch
      %44 = sbr.rel (0) target = $region17
    $region16: #{tpu_custom_call.1} parent=1 // pred_region
      %45 = dma.done [#allocation4], 512
    $region17: #{tpu_custom_call.1} parent=1 // pred_fallthru
      _
    %46 = vsyncpa [#allocation3], 1
    %47 = vsyncpa [#allocation4], 1

</llo_original>
